<compile_context>
chip_gen: v5e
topology: v5e:2x2
jax: 0.10.0
libtpu: 0.0.40
codegen_flags: <defaults>
</compile_context>

<pallas_src>
import functools

import jax
import jax.numpy as jnp
import numpy as np
from jax.experimental import pallas as pl
from jax.experimental.pallas import tpu as pltpu


# ---------------------------------------------------------------------------
# Kernels
# ---------------------------------------------------------------------------
def _ln_kernel(x_ref, g_ref, b_ref, o_ref, *, eps):
    # x_ref : (block_rows, D)  rows on sublanes, normalized dim on lanes
    # g_ref : (1, D)           LayerNorm weight
    # b_ref : (1, D)           LayerNorm bias
    # o_ref : (block_rows, D)
    x = x_ref[...].astype(jnp.float32)
    mean = jnp.mean(x, axis=-1, keepdims=True)            # lane reduce (XLU)
    ex2 = jnp.mean(x * x, axis=-1, keepdims=True)         # single-pass stats
    var = jnp.maximum(ex2 - mean * mean, 0.0)
    y = (x - mean) * jax.lax.rsqrt(var + eps)              # rsqrt -> EUP
    y = y * g_ref[...].astype(jnp.float32) + b_ref[...].astype(jnp.float32)
    o_ref[...] = y.astype(o_ref.dtype)


def _ln_proj_kernel(x_ref, g_ref, b_ref, w_ref, wb_ref, o_ref, *, eps):
    # Fused PreNorm + leading Linear of fn:  o = LayerNorm(x) @ W + b_w
    x = x_ref[...].astype(jnp.float32)
    mean = jnp.mean(x, axis=-1, keepdims=True)
    ex2 = jnp.mean(x * x, axis=-1, keepdims=True)
    var = jnp.maximum(ex2 - mean * mean, 0.0)
    y = (x - mean) * jax.lax.rsqrt(var + eps)
    y = y * g_ref[...].astype(jnp.float32) + b_ref[...].astype(jnp.float32)
    out = jnp.dot(y.astype(w_ref.dtype), w_ref[...],
                  preferred_element_type=jnp.float32)      # MXU (idle otherwise)
    out = out + wb_ref[...].astype(jnp.float32)
    o_ref[...] = out.astype(o_ref.dtype)


# ---------------------------------------------------------------------------
# Wrapper-side sizing helpers
# ---------------------------------------------------------------------------
def _vmem_capacity_bytes():
    """Physical per-core VMEM, with a v7x-safe fallback."""
    try:
        info = pltpu.get_tpu_info()
        cap = getattr(info, "vmem_capacity_bytes", None)
        if cap:
            return int(cap)
    except Exception:
        pass
    return 64 * 1024 * 1024  # smallest across v5e/v6e/v7x -> always safe


def _pick_block_rows(n_rows, bytes_per_row, vmem_cap, row_align, reserved=0):
    """Largest row block whose estimated VMEM footprint fits ~half of VMEM."""
    target = max((vmem_cap // 2) - reserved, row_align * bytes_per_row)
    br = max(target // max(bytes_per_row, 1), row_align)
    if br >= n_rows:
        return n_rows                       # full-extent block is allowed
    return max((br // row_align) * row_align, row_align)


def _layer_norm_ref(x, gamma, beta, *, eps=1e-5):
    xf = x.astype(jnp.float32)
    mean = jnp.mean(xf, axis=-1, keepdims=True)
    var = jnp.mean(jnp.square(xf - mean), axis=-1, keepdims=True)
    y = (xf - mean) * jax.lax.rsqrt(var + eps)
    y = y * gamma.astype(jnp.float32) + beta.astype(jnp.float32)
    return y.astype(x.dtype)


# ---------------------------------------------------------------------------
# Public entry point: PreNorm forward
# ---------------------------------------------------------------------------
def pre_norm(x, gamma, beta, fn=None, *, eps=1e-5, block_rows=None,
             fn_weight=None, fn_bias=None, **fn_kwargs):
    """PreNorm forward: fn(LayerNorm(x), **fn_kwargs).

    x         : (..., dim)   channels-last, same layout torch LayerNorm uses
    gamma     : (dim,)       LayerNorm weight
    beta      : (dim,)       LayerNorm bias
    fn        : optional JAX callable applied to the (projected) output.
    fn_weight : optional (dim, N) — leading nn.Linear of `fn`, fused in-kernel.
    fn_bias   : optional (N,)     — bias of that Linear.
    """
    orig_shape = x.shape
    D = int(orig_shape[-1])
    R = int(np.prod(orig_shape[:-1])) if len(orig_shape) > 1 else 1

    # --- tiny feature dims: lane axis mostly idle + masked partial stores ---
    # Review-sanctioned fallback to plain XLA for D < 128.
    # TODO(synk): lane-pack 128//D rows per vreg row with a segmented in-kernel
    # reduce to keep small-D LayerNorm on the Pallas path.
    if D < 128:
        y = _layer_norm_ref(x, gamma, beta, eps=eps)
        if fn_weight is not None:
            y = jnp.dot(y, fn_weight)
            if fn_bias is not None:
                y = y + fn_bias
            y = y.astype(x.dtype)
        return fn(y, **fn_kwargs) if fn is not None else y

    # Contiguous reshape only — no pads, no transposes, no extra HBM passes.
    x2 = x.reshape(R, D)
    g2 = gamma.reshape(1, D)
    b2 = beta.reshape(1, D)

    itemsize = x.dtype.itemsize
    out_dtype = x.dtype
    # Native packed-sublane tile height: 8 rows for 4-byte, 16 for 2-byte,
    # 32 for 1-byte dtypes.
    row_align = {4: 8, 2: 16, 1: 32}.get(itemsize, 8)

    vmem_cap = _vmem_capacity_bytes()
    vmem_limit = int(min((vmem_cap * 3) // 4, 96 * 1024 * 1024))

    fused = fn_weight is not None
    if fused:
        W2 = fn_weight.reshape(D, -1)
        N = int(W2.shape[-1])
        wb = fn_bias if fn_bias is not None else jnp.zeros((N,), W2.dtype)
        wb2 = wb.reshape(1, N)
        # per-row VMEM estimate: 2x double-buffered input + 2x output (I/O
        # dtype) + ~3 f32 temporaries on D + f32 matmul result on N.
        bytes_per_row = (2 * D * itemsize + 12 * D
                         + 2 * N * out_dtype.itemsize + 4 * N)
        reserved = 2 * D * N * W2.dtype.itemsize   # resident weight block
    else:
        N = D
        bytes_per_row = 2 * D * itemsize + 2 * D * out_dtype.itemsize + 12 * D
        reserved = 0

    if block_rows is None:
        block_rows = _pick_block_rows(R, bytes_per_row, vmem_cap, row_align,
                                      reserved)
    else:
        block_rows = int(block_rows)
        if block_rows >= R:
            block_rows = R
        else:
            block_rows = max((block_rows // row_align) * row_align, row_align)
            block_rows = min(block_rows, R)

    grid = (pl.cdiv(R, block_rows),)

    if fused:
        kernel = functools.partial(_ln_proj_kernel, eps=eps)
        in_specs = [
            pl.BlockSpec((block_rows, D), lambda i: (i, 0)),
            pl.BlockSpec((1, D), lambda i: (0, 0)),
            pl.BlockSpec((1, D), lambda i: (0, 0)),
            pl.BlockSpec((D, N), lambda i: (0, 0)),
            pl.BlockSpec((1, N), lambda i: (0, 0)),
        ]
        args = (x2, g2, b2, W2, wb2)
    else:
        kernel = functools.partial(_ln_kernel, eps=eps)
        in_specs = [
            pl.BlockSpec((block_rows, D), lambda i: (i, 0)),
            pl.BlockSpec((1, D), lambda i: (0, 0)),
            pl.BlockSpec((1, D), lambda i: (0, 0)),
        ]
        args = (x2, g2, b2)

    y2 = pl.pallas_call(
        kernel,
        out_shape=jax.ShapeDtypeStruct((R, N), out_dtype),
        grid_spec=pltpu.PrefetchScalarGridSpec(
            num_scalar_prefetch=0,
            grid=grid,
            in_specs=in_specs,
            out_specs=pl.BlockSpec((block_rows, N), lambda i: (i, 0)),
        ),
        compiler_params=pltpu.CompilerParams(
            dimension_semantics=("parallel",),   # row blocks shard across TCs
            vmem_limit_bytes=vmem_limit,
        ),
    )(*args)

    y = y2.reshape(orig_shape[:-1] + (N,))
    return fn(y, **fn_kwargs) if fn is not None else y


# ---------------------------------------------------------------------------
# Pure-JAX reference (correctness verification only)
# ---------------------------------------------------------------------------
def pre_norm_ref(x, gamma, beta, fn=None, *, eps=1e-5, fn_weight=None,
                 fn_bias=None, **fn_kwargs):
    y = _layer_norm_ref(x, gamma, beta, eps=eps)
    if fn_weight is not None:
        yf = jnp.dot(y.astype(jnp.float32), fn_weight.astype(jnp.float32))
        if fn_bias is not None:
            yf = yf + fn_bias.astype(jnp.float32)
        y = yf.astype(x.dtype)
    return fn(y, **fn_kwargs) if fn is not None else y


if __name__ == "__main__":
    key = jax.random.PRNGKey(0)
    ks = jax.random.split(key, 12)

    # ---- Test 1: f32, dim=128, fn = elementwise GELU applied outside ------
    B, S, D = 2, 8, 128
    x = jax.random.normal(ks[0], (B, S, D), jnp.float32)
    gamma = 1.0 + 0.1 * jax.random.normal(ks[1], (D,), jnp.float32)
    beta = 0.1 * jax.random.normal(ks[2], (D,), jnp.float32)

    out = pre_norm(x, gamma, beta, fn=jax.nn.gelu)
    jax.block_until_ready(out)
    ref = pre_norm_ref(x, gamma, beta, fn=jax.nn.gelu)
    assert out.shape == (B, S, D)
    np.testing.assert_allclose(np.asarray(out), np.asarray(ref),
                               atol=1e-5, rtol=1e-5)

    # ---- Test 2: bf16 input, multi-block grid with masked partial final ---
    # ---- block (rows = 3*401 = 1203, block_rows = 256, align 16) ----------
    B2, S2, D2 = 3, 401, 256
    xb = jax.random.normal(ks[3], (B2, S2, D2), jnp.float32).astype(jnp.bfloat16)
    g2 = 1.0 + 0.1 * jax.random.normal(ks[4], (D2,), jnp.float32)
    b2 = 0.05 * jnp.ones((D2,), jnp.float32)

    out2 = pre_norm(xb, g2, b2, block_rows=256)
    jax.block_until_ready(out2)
    ref2 = pre_norm_ref(xb, g2, b2)
    assert out2.dtype == jnp.bfloat16 and out2.shape == (B2, S2, D2)
    np.testing.assert_allclose(np.asarray(out2, dtype=np.float32),
                               np.asarray(ref2, dtype=np.float32),
                               atol=2e-2, rtol=2e-2)

    # ---- Test 3: fused fn-Linear epilogue (LayerNorm + y @ W + b in one ----
    # ---- kernel, no HBM round trip of the normalized activation) ----------
    Dp, Np = 128, 128
    x3 = jax.random.normal(ks[5], (2, 8, Dp), jnp.float32)
    g3 = 1.0 + 0.1 * jax.random.normal(ks[6], (Dp,), jnp.float32)
    b3 = 0.1 * jax.random.normal(ks[7], (Dp,), jnp.float32)
    W = 0.1 * jax.random.normal(ks[8], (Dp, Np), jnp.float32)
    wb = 0.1 * jax.random.normal(ks[9], (Np,), jnp.float32)

    out3 = pre_norm(x3, g3, b3, fn_weight=W, fn_bias=wb)
    jax.block_until_ready(out3)
    ref3 = pre_norm_ref(x3, g3, b3, fn_weight=W, fn_bias=wb)
    assert out3.shape == (2, 8, Np)
    np.testing.assert_allclose(np.asarray(out3), np.asarray(ref3),
                               atol=2e-2, rtol=2e-2)

    # ---- Test 4: tiny dim (D=32) takes the review-sanctioned XLA fallback --
    D4 = 32
    x4 = jax.random.normal(ks[10], (2, 8, D4), jnp.float32)
    g4 = 1.0 + 0.1 * jax.random.normal(ks[11], (D4,), jnp.float32)
    b4 = 0.1 * jnp.ones((D4,), jnp.float32)
    out4 = pre_norm(x4, g4, b4)
    jax.block_until_ready(out4)
    ref4 = pre_norm_ref(x4, g4, b4)
    np.testing.assert_allclose(np.asarray(out4), np.asarray(ref4),
                               atol=1e-5, rtol=1e-5)

    print("KERNEL_OK")
</pallas_src>

<mosaic_0001>
module attributes {stable_mosaic.version = 11 : i64} {
  func.func @_ln_kernel(%arg0: i32, %arg1: memref<16x128xf32, #tpu.memory_space<vmem>>, %arg2: memref<1x128xf32, #tpu.memory_space<vmem>>, %arg3: memref<1x128xf32, #tpu.memory_space<vmem>>, %arg4: memref<16x128xf32, #tpu.memory_space<vmem>>) attributes {dimension_semantics = [#tpu.dimension_semantics<parallel>], iteration_bounds = array<i64: 1>, scalar_prefetch = 0 : i64, scratch_operands = 0 : i64, tpu.core_type = #tpu.core_type<tc>, window_params = [{transform_indices = @transform_0, window_bounds = array<i64: 16, 128>}, {pipeline_mode = #tpu.pipeline_mode<synchronous>, transform_indices = @transform_1, window_bounds = array<i64: 1, 128>}, {pipeline_mode = #tpu.pipeline_mode<synchronous>, transform_indices = @transform_2, window_bounds = array<i64: 1, 128>}, {transform_indices = @transform_3, window_bounds = array<i64: 16, 128>}]} {
    %c0 = arith.constant 0 : index
    %c0_0 = arith.constant 0 : index
    %0 = vector.load %arg1[%c0, %c0_0] : memref<16x128xf32, #tpu.memory_space<vmem>>, vector<16x128xf32>
    %cst = arith.constant dense<0.000000e+00> : vector<16xf32>
    %1 = vector.multi_reduction <add>, %0, %cst [1] : vector<16x128xf32> to vector<16xf32>
    %2 = vector.shape_cast %1 : vector<16xf32> to vector<16x1xf32>
    %cst_1 = arith.constant 1.280000e+02 : f32
    %3 = vector.broadcast %cst_1 : f32 to vector<16x1xf32>
    %4 = arith.divf %2, %3 : vector<16x1xf32>
    %5 = arith.mulf %0, %0 : vector<16x128xf32>
    %cst_2 = arith.constant dense<0.000000e+00> : vector<16xf32>
    %6 = vector.multi_reduction <add>, %5, %cst_2 [1] : vector<16x128xf32> to vector<16xf32>
    %7 = vector.shape_cast %6 : vector<16xf32> to vector<16x1xf32>
    %cst_3 = arith.constant 1.280000e+02 : f32
    %8 = vector.broadcast %cst_3 : f32 to vector<16x1xf32>
    %9 = arith.divf %7, %8 : vector<16x1xf32>
    %10 = arith.mulf %4, %4 : vector<16x1xf32>
    %11 = arith.subf %9, %10 : vector<16x1xf32>
    %cst_4 = arith.constant 0.000000e+00 : f32
    %12 = vector.broadcast %cst_4 : f32 to vector<16x1xf32>
    %13 = arith.maximumf %11, %12 : vector<16x1xf32>
    %14 = vector.broadcast %4 : vector<16x1xf32> to vector<16x128xf32>
    %15 = arith.subf %0, %14 : vector<16x128xf32>
    %cst_5 = arith.constant 9.99999974E-6 : f32
    %16 = vector.broadcast %cst_5 : f32 to vector<16x1xf32>
    %17 = arith.addf %13, %16 : vector<16x1xf32>
    %18 = math.rsqrt %17 : vector<16x1xf32>
    %19 = vector.broadcast %18 : vector<16x1xf32> to vector<16x128xf32>
    %20 = arith.mulf %15, %19 : vector<16x128xf32>
    %c0_6 = arith.constant 0 : index
    %c0_7 = arith.constant 0 : index
    %21 = vector.load %arg2[%c0_6, %c0_7] : memref<1x128xf32, #tpu.memory_space<vmem>>, vector<1x128xf32>
    %22 = vector.broadcast %21 : vector<1x128xf32> to vector<16x128xf32>
    %23 = arith.mulf %20, %22 : vector<16x128xf32>
    %c0_8 = arith.constant 0 : index
    %c0_9 = arith.constant 0 : index
    %24 = vector.load %arg3[%c0_8, %c0_9] : memref<1x128xf32, #tpu.memory_space<vmem>>, vector<1x128xf32>
    %25 = vector.broadcast %24 : vector<1x128xf32> to vector<16x128xf32>
    %26 = arith.addf %23, %25 : vector<16x128xf32>
    %c0_10 = arith.constant 0 : index
    %c0_11 = arith.constant 0 : index
    %27 = vector.load %arg4[%c0_10, %c0_11] : memref<16x128xf32, #tpu.memory_space<vmem>>, vector<16x128xf32>
    tpu.vector_store %arg4[%c0_10, %c0_11], %26 {strides = array<i32>} : memref<16x128xf32, #tpu.memory_space<vmem>>, vector<16x128xf32>,
    return
  }
  func.func @transform_0(%arg0: i32) -> (i32, i32) {
    %c0_i32 = arith.constant 0 : i32
    %c0_i32_0 = arith.constant 0 : i32
    return %arg0, %c0_i32 : i32, i32
  }
  func.func @transform_1(%arg0: i32) -> (i32, i32) {
    %c0_i32 = arith.constant 0 : i32
    %c0_i32_0 = arith.constant 0 : i32
    %c0_i32_1 = arith.constant 0 : i32
    return %c0_i32, %c0_i32_0 : i32, i32
  }
  func.func @transform_2(%arg0: i32) -> (i32, i32) {
    %c0_i32 = arith.constant 0 : i32
    %c0_i32_0 = arith.constant 0 : i32
    %c0_i32_1 = arith.constant 0 : i32
    return %c0_i32, %c0_i32_0 : i32, i32
  }
  func.func @transform_3(%arg0: i32) -> (i32, i32) {
    %c0_i32 = arith.constant 0 : i32
    %c0_i32_0 = arith.constant 0 : i32
    return %arg0, %c0_i32 : i32, i32
  }
}

</mosaic_0001>

<llo_original>
// kernel: tpu_custom_call.1
$region0: #{tpu_custom_call.1}
  #allocation0 [shape = 'u32[]', space=smem, size = 0x4, offset = 0x4, fixed_abs, tag = 'smem constant byte address 0x4 - core index']
  #allocation1 [shape = 'u32[72,128]{1,0:T(1,128)}', space=vmem, size = 0x9000, scoped, tag = 'internal scratch']
  %s0 = inlined_call_operand.hbm [shape: f32[16,128], index: 0, kind: input, shape index: {}]
  %s1 = inlined_call_operand.hbm [shape: f32[1,128], index: 1, kind: input, shape index: {}]
  %s2 = inlined_call_operand.vmem [shape: f32[1,128], index: 2, kind: input, shape index: {}]
  %s3 = inlined_call_operand.hbm [shape: f32[16,128], index: 3, kind: output, shape index: {}]
  %s4 = sld [smem:[#allocation0]]
  $region30: #{tpu_custom_call.1} parent=0
    _
  %s6 = ssub.s32 1, %s4
  %s7 = scalar_select 0, %s6, %s4
  $region1: #{tpu_custom_call.1} parent=0
    #allocation2 [shape = 'u8[8192]{0}', space=vmem, size = 0x2000, scoped, tag = 'input window, operand 0, single buffered']
    #allocation3 [shape = 's32[1]{0}', space=sflag, size = 0x4, scoped, tag = 'scoped memory for tpu_custom_call.1']
    #allocation4 [shape = 's32[1]{0}', space=sflag, size = 0x4, scoped, tag = 'scoped memory for tpu_custom_call.1']
    #allocation5 [shape = 'u8[512]{0}', space=vmem, size = 0x400, scoped, tag = 'input window, operand 1, single buffered']
    #allocation6 [shape = 's32[1]{0}', space=sflag, size = 0x4, scoped, tag = 'scoped memory for tpu_custom_call.1']
    #allocation7 [shape = 'u8[8192]{0}', space=vmem, size = 0x2000, scoped, tag = 'output window, operand 0, single buffered']
    %8 = vsyncpa [#allocation3], 0
    %9 = vsyncpa [#allocation6], 0
    %10 = vsyncpa [#allocation4], 0
    // Predicated region
    $region2: #{tpu_custom_call.1} parent=1 // pred_check
      _
    $region3: #{tpu_custom_call.1} parent=1 // pred_check_branch
      %12 = sbr.rel (0) target = $region5
    $region4: #{tpu_custom_call.1} parent=1 // pred_region
      %14 = vsyncadd [#allocation3], 0
      %s15 = sshll.u32 %s0, 4
      %s16 = int_to_ptr.hbm [resolvable:$true] %s15
      %s17 = sshll.u32 [#allocation2], 4
      %s18 = int_to_ptr.vmem [resolvable:$true] %s17
      %23 = dma.hbm_to_vmem [thread:$0]  %s16, 256, %s18, [#allocation3], 128, 128, 8
    $region5: #{tpu_custom_call.1} parent=1 // pred_fallthru
      _
    // Predicated region
    $region6: #{tpu_custom_call.1} parent=1 // pred_check
      _
    $region7: #{tpu_custom_call.1} parent=1 // pred_check_branch
      %25 = sbr.rel (0) target = $region9
    $region8: #{tpu_custom_call.1} parent=1 // pred_region
      %27 = vsyncadd [#allocation6], 0
      %s29 = sshll.u32 %s1, 4
      %s30 = int_to_ptr.hbm [resolvable:$true] %s29
      %s31 = sshll.u32 [#allocation5], 4
      %s32 = int_to_ptr.vmem [resolvable:$true] %s31
      %34 = dma.hbm_to_vmem [thread:$0]  %s30, 16, %s32, [#allocation6]
    $region9: #{tpu_custom_call.1} parent=1 // pred_fallthru
      _
    // Predicated region
    $region10: #{tpu_custom_call.1} parent=1 // pred_check
      _
    $region11: #{tpu_custom_call.1} parent=1 // pred_check_branch
      %36 = sbr.rel (0) target = $region13
    $region12: #{tpu_custom_call.1} parent=1 // pred_region
      _
    $region13: #{tpu_custom_call.1} parent=1 // pred_fallthru
      _
    // Predicated region
    $region14: #{tpu_custom_call.1} parent=1 // pred_check
      _
    $region15: #{tpu_custom_call.1} parent=1 // pred_check_branch
      %38 = sbr.rel (0) target = $region17
    $region16: #{tpu_custom_call.1} parent=1 // pred_region
      %40 = dma.done [#allocation3], 256
    $region17: #{tpu_custom_call.1} parent=1 // pred_fallthru
      _
    // Predicated region
    $region18: #{tpu_custom_call.1} parent=1 // pred_check
      _
    $region19: #{tpu_custom_call.1} parent=1 // pred_check_branch
      %42 = sbr.rel (0) target = $region21
    $region20: #{tpu_custom_call.1} parent=1 // pred_region
      %44 = dma.done [#allocation6], 16
    $region21: #{tpu_custom_call.1} parent=1 // pred_fallthru
      _
    %v45 = vld [vmem:[#allocation2] sm:$0xff]
    %v46 = vld [vmem:[#allocation2 + $0x8] sm:$0xff]
    %47 = vadd.xlane.f32.xlu0 %v45
    %v48 = vpop.xlane.xlu0 %47
    %49 = vadd.xlane.f32.xlu0 %v46
    %v50 = vpop.xlane.xlu0 %49
    %v51 = vrcp.pop 128.0
    %v52 = vmul.f32 128.0, %v51
    %v53 = vsub.f32 1.0, %v52
    %v54 = vmul.f32 %v51, %v53
    %v55 = vadd.f32 %v51, %v54
    %vm56 = vweird.f32 %v51
    %v57 = vsel %vm56, %v51, %v55
    %v58 = vmul.f32 %v48, %v57
    %v59 = vmul.f32 %v50, %v57
    %v60 = vmul.f32 %v45, %v45
    %v61 = vmul.f32 %v46, %v46
    %62 = vadd.xlane.f32.xlu0 %v60
    %v63 = vpop.xlane.xlu0 %62
    %64 = vadd.xlane.f32.xlu0 %v61
    %v65 = vpop.xlane.xlu0 %64
    %v66 = vmul.f32 %v63, %v57
    %v67 = vmul.f32 %v65, %v57
    %v68 = vmul.f32 %v58, %v58
    %v69 = vmul.f32 %v59, %v59
    %v70 = vsub.f32 %v66, %v68
    %v71 = vsub.f32 %v67, %v69
    %v72 = vmax.f32 %v70, 0.0
    %v73 = vmax.f32 %v71, 0.0
    %v74 = vsub.f32 %v45, %v58
    %v75 = vsub.f32 %v46, %v59
    %v76 = vadd.f32 %v72, 1e-05
    %v77 = vadd.f32 %v73, 1e-05
    %v78 = vrsqrt.pop %v76
    %v79 = vmul.f32 %v78, %v76
    %v80 = vmul.f32 %v79, %v78
    %v81 = vmul.f32 0.5, %v80
    %v82 = vsub.f32 1.5, %v81
    %v83 = vmul.f32 %v78, %v82
    %vm84 = vweird.f32 %v76
    %vm85 = vweird.f32 %v78
    %vm86 = vmor %vm84, %vm85
    %v87 = vsel %vm86, %v78, %v83
    %v88 = vrsqrt.pop %v77
    %v89 = vmul.f32 %v88, %v77
    %v90 = vmul.f32 %v89, %v88
    %v91 = vmul.f32 0.5, %v90
    %v92 = vsub.f32 1.5, %v91
    %v93 = vmul.f32 %v88, %v92
    %vm94 = vweird.f32 %v77
    %vm95 = vweird.f32 %v88
    %vm96 = vmor %vm94, %vm95
    %v97 = vsel %vm96, %v88, %v93
    %v98 = vmul.f32 %v74, %v87
    %v99 = vmul.f32 %v75, %v97
    %v100 = vld [vmem:[#allocation5] sm:$0x1]
    %v102 = vperm.slane %v100, 0
    %v104 = vmul.f32 %v98, %v102
    %v105 = vmul.f32 %v99, %v102
    %v106 = vld [vmem:[%s2] sm:$0x1]
    %v108 = vperm.slane %v106, 0
    %v110 = vadd.f32 %v104, %v108
    %v111 = vadd.f32 %v105, %v108
    %112 = vst [vmem:[#allocation7] sm:$0xff] %v110
    %113 = vst [vmem:[#allocation7 + $0x8] sm:$0xff] %v111
    // Predicated region
    $region22: #{tpu_custom_call.1} parent=1 // pred_check
      _
    $region23: #{tpu_custom_call.1} parent=1 // pred_check_branch
      %115 = sbr.rel (0) target = $region25
    $region24: #{tpu_custom_call.1} parent=1 // pred_region
      %117 = vsyncadd [#allocation4], 0
      %s118 = sshll.u32 [#allocation7], 4
      %s119 = int_to_ptr.vmem [resolvable:$true] %s118
      %s120 = sshll.u32 %s3, 4
      %s121 = int_to_ptr.hbm [resolvable:$true] %s120
      %126 = dma.vmem_to_hbm [thread:$0]  %s119, 256, %s121, [#allocation4], 128, 128, 8
    $region25: #{tpu_custom_call.1} parent=1 // pred_fallthru
      _
    // Predicated region
    $region26: #{tpu_custom_call.1} parent=1 // pred_check
      _
    $region27: #{tpu_custom_call.1} parent=1 // pred_check_branch
      %128 = sbr.rel (0) target = $region29
    $region28: #{tpu_custom_call.1} parent=1 // pred_region
      %130 = dma.done [#allocation4], 256
    $region29: #{tpu_custom_call.1} parent=1 // pred_fallthru
      _
    %131 = vsyncpa [#allocation3], 1
    %132 = vsyncpa [#allocation6], 1
    %133 = vsyncpa [#allocation4], 1

</llo_original>
